<compile_context>
chip_gen: v5e
topology: v5e:2x2
jax: 0.10.0
libtpu: 0.0.40
codegen_flags: <defaults>
</compile_context>

<pallas_src>
import math

import jax
import jax.numpy as jnp
from jax.experimental import pallas as pl
from jax.experimental.pallas import tpu as pltpu


# -----------------------------------------------------------------------------
# Kernel: CLS row of ones + (x + pe) slab for the current block.
# Works for both the 3-D (S, TN, TE) and the flattened 2-D (S, TC) layouts.
# -----------------------------------------------------------------------------
def _pe_cls_kernel(x_ref, pe_ref, o_ref):
    s = x_ref.shape[0]
    # Row 0 of this block: CLS token of ones (matches torch.ones(1, N, d_model)).
    o_ref[pl.ds(0, 1)] = jnp.ones((1,) + tuple(o_ref.shape[1:]), dtype=o_ref.dtype)
    # Rows 1..S: x + broadcast positional encoding.
    o_ref[pl.ds(1, s)] = (x_ref[...] + pe_ref[...]).astype(o_ref.dtype)


# -----------------------------------------------------------------------------
# Host-side construction of the sinusoidal table (same math as the reference).
# -----------------------------------------------------------------------------
def sinusoidal_pe(seq_length: int, d_model: int, dtype=jnp.float32):
    position = jnp.arange(seq_length, dtype=jnp.float32)[:, None]
    div_term = jnp.exp(jnp.arange(0, d_model, 2, dtype=jnp.float32)
                       * (-math.log(10000.0) / d_model))
    ang = position * div_term                                  # (S, ceil(E/2))
    pe = jnp.zeros((seq_length, d_model), jnp.float32)
    pe = pe.at[:, 0::2].set(jnp.sin(ang))
    pe = pe.at[:, 1::2].set(jnp.cos(ang)[:, : d_model // 2])   # robust for odd E
    return pe.astype(dtype)


# -----------------------------------------------------------------------------
# Tiling helpers.
# -----------------------------------------------------------------------------
_TARGET_BLOCK_BYTES = 4 * 1024 * 1024   # per pipeline stage (x + pe + out blocks)


def _largest_aligned_divisor(dim: int, align: int, cap: int) -> int:
    """Largest multiple of `align` that divides `dim`, <= cap.
    Falls back to the full dim if `dim` is not a multiple of `align`."""
    if dim % align != 0:
        return dim
    cap = max(align, min(cap, dim))
    best, t = align, align
    while t <= cap:
        if dim % t == 0:
            best = t
        t += align
    return best


def _vmem_limit_bytes(block_elems: int, itemsize: int) -> int:
    needed = 2 * block_elems * itemsize            # double-buffered blocks
    limit = needed + needed // 2 + (4 << 20)       # headroom for Mosaic internals
    return int(min(max(limit, 32 << 20), 64 << 20))  # within v7x physical VMEM


# -----------------------------------------------------------------------------
# Path A: lane/sublane-aligned 3-D tiling (E % 128 == 0 and N % 8 == 0).
# -----------------------------------------------------------------------------
def _forward_3d(x, pe):
    S, N, E = x.shape
    itemsize = jnp.dtype(x.dtype).itemsize
    budget_elems = _TARGET_BLOCK_BYTES // itemsize

    te = _largest_aligned_divisor(E, 128, 512)
    per_batch_row = (2 * S + 1) * te               # x row + out row per batch elem
    tn_cap = max(8, (budget_elems - S * te) // per_batch_row)
    tn = _largest_aligned_divisor(N, 8, tn_cap)

    block_elems = S * tn * te + S * te + (S + 1) * tn * te
    cost = pl.CostEstimate(
        flops=S * N * E, transcendentals=0,
        bytes_accessed=(S * N * E + S * E + (S + 1) * N * E) * itemsize)

    return pl.pallas_call(
        _pe_cls_kernel,
        out_shape=jax.ShapeDtypeStruct((S + 1, N, E), x.dtype),
        grid=(N // tn, E // te),
        in_specs=[pl.BlockSpec((S, tn, te), lambda n, e: (0, n, e)),
                  pl.BlockSpec((S, 1, te), lambda n, e: (0, 0, e))],
        out_specs=pl.BlockSpec((S + 1, tn, te), lambda n, e: (0, n, e)),
        compiler_params=pltpu.CompilerParams(
            dimension_semantics=("parallel", "parallel"),
            vmem_limit_bytes=_vmem_limit_bytes(block_elems, itemsize)),
        cost_estimate=cost,
    )(x, pe[:, None, :])


# -----------------------------------------------------------------------------
# Path B: flattened 2-D tiling (lane-dense even when E < 128 / unaligned).
# pe is pre-broadcast to (S, N*E) in the wrapper (constant-folded by XLA).
# -----------------------------------------------------------------------------
def _forward_2d(x, pe):
    S, N, E = x.shape
    C = N * E
    itemsize = jnp.dtype(x.dtype).itemsize
    budget_elems = _TARGET_BLOCK_BYTES // itemsize

    tc_cap = max(128, budget_elems // (3 * S + 1))
    tc = _largest_aligned_divisor(C, 128, tc_cap)

    x2 = x.reshape(S, C)
    pe2 = jnp.broadcast_to(pe[:, None, :], (S, N, E)).reshape(S, C)

    block_elems = 2 * S * tc + (S + 1) * tc
    cost = pl.CostEstimate(
        flops=S * N * E, transcendentals=0,
        bytes_accessed=(2 * S * C + (S + 1) * C) * itemsize)

    out2 = pl.pallas_call(
        _pe_cls_kernel,
        out_shape=jax.ShapeDtypeStruct((S + 1, C), x.dtype),
        grid=(C // tc,),
        in_specs=[pl.BlockSpec((S, tc), lambda c: (0, c)),
                  pl.BlockSpec((S, tc), lambda c: (0, c))],
        out_specs=pl.BlockSpec((S + 1, tc), lambda c: (0, c)),
        compiler_params=pltpu.CompilerParams(
            dimension_semantics=("parallel",),
            vmem_limit_bytes=_vmem_limit_bytes(block_elems, itemsize)),
        cost_estimate=cost,
    )(x2, pe2)
    return out2.reshape(S + 1, N, E)


# -----------------------------------------------------------------------------
# Wrapper: PositionalEncoding.forward
# -----------------------------------------------------------------------------
def positional_encoding_forward(x):
    """x: (S, N, E) -> (S+1, N, E).  Dropout is treated as identity."""
    S, N, E = x.shape
    pe = sinusoidal_pe(S, E, x.dtype)              # (S, E) constant
    # TODO(synk): nn.Dropout(p=0.1) is identity here (inference / eval mode);
    # training mode would need pltpu.prng_seed + prng_random_bits masking.
    if E % 128 == 0 and N % 8 == 0:
        return _forward_3d(x, pe)
    return _forward_2d(x, pe)


# -----------------------------------------------------------------------------
if __name__ == "__main__":
    SEQ, BATCH, D_MODEL = 8, 2, 32

    key = jax.random.PRNGKey(0)
    x = jax.random.normal(key, (SEQ, BATCH, D_MODEL), jnp.float32)

    fwd = jax.jit(positional_encoding_forward)
    out = jax.block_until_ready(fwd(x))

    # Pure-JAX reference (same math as the PyTorch module, dropout = identity).
    pe_ref = sinusoidal_pe(SEQ, D_MODEL, jnp.float32)[:, None, :]
    ref = jnp.concatenate(
        [jnp.ones((1, BATCH, D_MODEL), jnp.float32), x + pe_ref], axis=0)
    assert out.shape == (SEQ + 1, BATCH, D_MODEL)
    assert bool(jnp.all(jnp.isfinite(out)))
    assert bool(jnp.allclose(out, ref, atol=1e-6, rtol=1e-6)), "mismatch (2-D path)"

    # Also exercise the lane/sublane-aligned 3-D tiled path at a small aligned shape.
    x3 = jax.random.normal(jax.random.PRNGKey(1), (16, 8, 256), jnp.float32)
    out3 = jax.block_until_ready(jax.jit(positional_encoding_forward)(x3))
    pe3 = sinusoidal_pe(16, 256, jnp.float32)[:, None, :]
    ref3 = jnp.concatenate(
        [jnp.ones((1, 8, 256), jnp.float32), x3 + pe3], axis=0)
    assert bool(jnp.allclose(out3, ref3, atol=1e-6, rtol=1e-6)), "mismatch (3-D path)"

    print("KERNEL_OK")
</pallas_src>

<mosaic_0001>
module attributes {stable_mosaic.version = 11 : i64} {
  func.func @_pe_cls_kernel(%arg0: i32, %arg1: memref<8x64xf32, #tpu.memory_space<vmem>>, %arg2: memref<8x64xf32, #tpu.memory_space<vmem>>, %arg3: memref<9x64xf32, #tpu.memory_space<vmem>>) attributes {dimension_semantics = [#tpu.dimension_semantics<parallel>], iteration_bounds = array<i64: 1>, scalar_prefetch = 0 : i64, scratch_operands = 0 : i64, tpu.core_type = #tpu.core_type<tc>, window_params = [{transform_indices = @transform_0, window_bounds = array<i64: 8, 64>}, {transform_indices = @transform_1, window_bounds = array<i64: 8, 64>}, {transform_indices = @transform_2, window_bounds = array<i64: 9, 64>}]} {
    %cst = arith.constant 1.000000e+00 : f32
    %0 = vector.broadcast %cst : f32 to vector<1x64xf32>
    %c0 = arith.constant 0 : index
    %c0_0 = arith.constant 0 : index
    %1 = vector.load %arg3[%c0, %c0_0] : memref<9x64xf32, #tpu.memory_space<vmem>>, vector<1x64xf32>
    tpu.vector_store %arg3[%c0, %c0_0], %0 {strides = array<i32>} : memref<9x64xf32, #tpu.memory_space<vmem>>, vector<1x64xf32>,
    %c0_1 = arith.constant 0 : index
    %c0_2 = arith.constant 0 : index
    %2 = vector.load %arg1[%c0_1, %c0_2] : memref<8x64xf32, #tpu.memory_space<vmem>>, vector<8x64xf32>
    %c0_3 = arith.constant 0 : index
    %c0_4 = arith.constant 0 : index
    %3 = vector.load %arg2[%c0_3, %c0_4] : memref<8x64xf32, #tpu.memory_space<vmem>>, vector<8x64xf32>
    %4 = arith.addf %2, %3 : vector<8x64xf32>
    %c1 = arith.constant 1 : index
    %c0_5 = arith.constant 0 : index
    %5 = vector.load %arg3[%c1, %c0_5] : memref<9x64xf32, #tpu.memory_space<vmem>>, vector<8x64xf32>
    tpu.vector_store %arg3[%c1, %c0_5], %4 {strides = array<i32>} : memref<9x64xf32, #tpu.memory_space<vmem>>, vector<8x64xf32>,
    return
  }
  func.func @transform_0(%arg0: i32) -> (i32, i32) {
    %c0_i32 = arith.constant 0 : i32
    %c0_i32_0 = arith.constant 0 : i32
    return %c0_i32, %arg0 : i32, i32
  }
  func.func @transform_1(%arg0: i32) -> (i32, i32) {
    %c0_i32 = arith.constant 0 : i32
    %c0_i32_0 = arith.constant 0 : i32
    return %c0_i32, %arg0 : i32, i32
  }
  func.func @transform_2(%arg0: i32) -> (i32, i32) {
    %c0_i32 = arith.constant 0 : i32
    %c0_i32_0 = arith.constant 0 : i32
    return %c0_i32, %arg0 : i32, i32
  }
}

</mosaic_0001>

<llo_original>
// kernel: positional_encoding_forward.1
$region0: #{positional_encoding_forward.1}
  #allocation0 [shape = 'u32[]', space=smem, size = 0x4, offset = 0x4, fixed_abs, tag = 'smem constant byte address 0x4 - core index']
  #allocation1 [shape = 'u32[72,128]{1,0:T(1,128)}', space=vmem, size = 0x9000, scoped, tag = 'internal scratch']
  %s0 = inlined_call_operand.vmem [shape: f32[8,64], index: 0, kind: input, shape index: {}]
  %s1 = inlined_call_operand.vmem [shape: f32[8,64], index: 1, kind: input, shape index: {}]
  %s2 = inlined_call_operand.vmem [shape: f32[9,64], index: 2, kind: output, shape index: {}]
  %s3 = sld [smem:[#allocation0]]
  $region18: #{positional_encoding_forward.1} parent=0
    _
  %s5 = ssub.s32 1, %s3
  %s6 = scalar_select 0, %s5, %s3
  // Predicated region
  $region2: #{positional_encoding_forward.1} parent=0 // pred_check
    _
  $region3: #{positional_encoding_forward.1} parent=0 // pred_check_branch
    %8 = sbr.rel (0) target = $region5
  $region4: #{positional_encoding_forward.1} parent=0 // pred_region
    _
  $region5: #{positional_encoding_forward.1} parent=0 // pred_fallthru
    _
  // Predicated region
  $region6: #{positional_encoding_forward.1} parent=0 // pred_check
    _
  $region7: #{positional_encoding_forward.1} parent=0 // pred_check_branch
    %10 = sbr.rel (0) target = $region9
  $region8: #{positional_encoding_forward.1} parent=0 // pred_region
    _
  $region9: #{positional_encoding_forward.1} parent=0 // pred_fallthru
    _
  %vm11 = vcmask 516096
  %12 = vst.msk [vmem:[%s2] sm:$0x1] %vm11, 1.0
  %v13 = vld [vmem:[%s0] sm:$0xff]
  %v14 = vld [vmem:[%s1] sm:$0xff]
  %v15 = vadd.f32 %v13, %v14
  %vm16 = vcmask 523264
  %17 = vst.msk [vmem:[%s2 + $0x1] sm:$0xff] %vm16, %v15
  // Predicated region
  $region10: #{positional_encoding_forward.1} parent=0 // pred_check
    _
  $region11: #{positional_encoding_forward.1} parent=0 // pred_check_branch
    %19 = sbr.rel (0) target = $region13
  $region12: #{positional_encoding_forward.1} parent=0 // pred_region
    _
  $region13: #{positional_encoding_forward.1} parent=0 // pred_fallthru
    _
  // Predicated region
  $region14: #{positional_encoding_forward.1} parent=0 // pred_check
    _
  $region15: #{positional_encoding_forward.1} parent=0 // pred_check_branch
    %21 = sbr.rel (0) target = $region17
  $region16: #{positional_encoding_forward.1} parent=0 // pred_region
    _
  $region17: #{positional_encoding_forward.1} parent=0 // pred_fallthru
    _

</llo_original>
